<compile_context>
chip_gen: v7x
topology: tpu7x:2x2x1
jax: 0.10.0
libtpu: 0.0.40
codegen_flags: <defaults>
</compile_context>

<pallas_src>
import functools

import jax
import jax.numpy as jnp
from jax.experimental import pallas as pl
from jax.experimental.pallas import tpu as pltpu

EPS = 1e-5


def _round_up(x, m):
    return (x + m - 1) // m * m


def custom_dl_kernel(x_ref, w_in_ref, b_in_ref, w_colsum_ref,
                     w_h_ref, b_h_ref, w_fc_ref, b_fc_ref, o_ref, *, num_layers):
    C, TT, F = x_ref.shape
    D = C * F
    cdt = w_in_ref.dtype        # matmul operand dtype (f32 or bf16); VPU math stays f32

    # Per-channel views of the raw (C, TT, F) input (no transpose / reshape needed).
    xs = [x_ref[c].astype(jnp.float32) for c in range(C)]          # each (TT, F)

    # LayerNorm statistics over the joint (C, F) axis, per time step.
    s = xs[0]
    for c in range(1, C):
        s = s + xs[c]
    mean = jnp.sum(s, axis=-1, keepdims=True) * (1.0 / D)          # (TT, 1)
    sq = jnp.square(xs[0] - mean)
    for c in range(1, C):
        sq = sq + jnp.square(xs[c] - mean)
    var = jnp.sum(sq, axis=-1, keepdims=True) * (1.0 / D)
    inv = jax.lax.rsqrt(var + EPS)                                 # (TT, 1)

    # in_layer (LN-affine already folded into W/b): matmul on RAW x, LayerNorm applied afterwards
    # as an exact rank-1 correction:  (x - mean)*inv @ W == inv*(x @ W) - (mean*inv)*colsum(W).
    acc = jnp.dot(xs[0].astype(cdt), w_in_ref[0], preferred_element_type=jnp.float32)
    for c in range(1, C):
        acc = acc + jnp.dot(xs[c].astype(cdt), w_in_ref[c],
                            preferred_element_type=jnp.float32)
    h = inv * acc - (mean * inv) * w_colsum_ref[...] + b_in_ref[...]
    h = jnp.maximum(h, 0.0)

    # CustomReluLinearLayer: L x (spectral-normalized Linear(H,H) + ReLU).
    # (Scale-up guard: switch to lax.fori_loop / a grid axis if num_layers grows large.)
    for l in range(num_layers):
        h = jnp.dot(h.astype(cdt), w_h_ref[l], preferred_element_type=jnp.float32) + b_h_ref[l]
        h = jnp.maximum(h, 0.0)

    # fc: Linear(H -> O_pad); output lanes padded to 128 in the wrapper -> unmasked dense store.
    o_ref[...] = (jnp.dot(h.astype(cdt), w_fc_ref[...], preferred_element_type=jnp.float32)
                  + b_fc_ref[...]).astype(o_ref.dtype)


def prepare_params(params, C, F, *, compute_dtype=jnp.float32, lane=128):
    """Parameter-setup-time glue: fold LN affine into the first linear, reshape, pad, cast."""
    D = C * F
    ln_w = params["ln_w"].reshape(1, D).astype(jnp.float32)
    ln_b = params["ln_b"].reshape(1, D).astype(jnp.float32)
    w_in = params["w_in"].astype(jnp.float32)          # (D, H), spectral-normalized
    b_in = params["b_in"].astype(jnp.float32)          # (1, H)
    H = w_in.shape[1]
    O = params["w_fc"].shape[1]
    O_pad = _round_up(O, lane)

    # Fold:  (xn*ln_w + ln_b) @ W + b  ==  xn @ (diag(ln_w) W) + (ln_b @ W + b)
    w_in_f = w_in * ln_w.T
    b_in_f = ln_b @ w_in + b_in
    w_in_c = w_in_f.reshape(C, F, H).astype(compute_dtype)          # (C, F, H)
    # Column sums of the (possibly bf16-cast) folded weight, for the rank-1 LN correction.
    w_colsum = w_in_c.astype(jnp.float32).reshape(D, H).sum(axis=0, keepdims=True)

    w_fc = jnp.zeros((H, O_pad), compute_dtype).at[:, :O].set(
        params["w_fc"].astype(compute_dtype))
    b_fc = jnp.zeros((1, O_pad), jnp.float32).at[:, :O].set(
        params["b_fc"].astype(jnp.float32))

    return dict(
        w_in=w_in_c, b_in=b_in_f, w_colsum=w_colsum,
        w_h=params["w_h"].astype(compute_dtype),
        b_h=params["b_h"].astype(jnp.float32),
        w_fc=w_fc, b_fc=b_fc)


def custom_dl_forward(x_ctf, kparams, *, num_layers, out_size, row_tile=128):
    """x_ctf: (C, T, F) fp32 -> (T, out_size) fp32, matching CustomDL.forward."""
    assert row_tile % 8 == 0
    C, T, F = x_ctf.shape
    D = C * F
    H = kparams["b_in"].shape[1]
    O_pad = kparams["w_fc"].shape[1]
    L = num_layers

    TT = min(_round_up(T, 8), row_tile)
    T_pad = _round_up(T, TT)
    x = x_ctf if T_pad == T else jnp.pad(x_ctf, ((0, 0), (0, T_pad - T), (0, 0)))

    grid = (T_pad // TT,)
    kernel = functools.partial(custom_dl_kernel, num_layers=L)

    flops = 2 * T_pad * (D * H + L * H * H + H * O_pad)
    bytes_accessed = int(x.size * x.dtype.itemsize
                         + sum(v.size * v.dtype.itemsize for v in kparams.values())
                         + T_pad * O_pad * 4)

    # Scale-up guard: if H/L grow so the resident weight stack approaches VMEM limits, add
    # pipeline_mode=pl.Buffered(1) on the constant-index weight specs (index_map is constant, so
    # double-buffering them is pure VMEM waste), and/or move num_layers onto a grid axis.
    out = pl.pallas_call(
        kernel,
        out_shape=jax.ShapeDtypeStruct((T_pad, O_pad), jnp.float32),
        grid_spec=pltpu.PrefetchScalarGridSpec(
            num_scalar_prefetch=0,
            grid=grid,
            in_specs=[
                pl.BlockSpec((C, TT, F), lambda i: (0, i, 0)),      # raw x row-tile (no transpose)
                pl.BlockSpec((C, F, H), lambda i: (0, 0, 0)),       # folded in_layer W, (C,F,H)
                pl.BlockSpec((1, H), lambda i: (0, 0)),             # folded in_layer b
                pl.BlockSpec((1, H), lambda i: (0, 0)),             # colsum(W_in) for LN factoring
                pl.BlockSpec((L, H, H), lambda i: (0, 0, 0)),       # hidden Ws
                pl.BlockSpec((L, 1, H), lambda i: (0, 0, 0)),       # hidden bs
                pl.BlockSpec((H, O_pad), lambda i: (0, 0)),         # fc W (lane-padded)
                pl.BlockSpec((1, O_pad), lambda i: (0, 0)),         # fc b (lane-padded)
            ],
            out_specs=pl.BlockSpec((TT, O_pad), lambda i: (i, 0)),
        ),
        compiler_params=pltpu.CompilerParams(dimension_semantics=("parallel",)),
        cost_estimate=pl.CostEstimate(flops=flops, transcendentals=T_pad,
                                      bytes_accessed=bytes_accessed),
    )(x, kparams["w_in"], kparams["b_in"], kparams["w_colsum"],
      kparams["w_h"], kparams["b_h"], kparams["w_fc"], kparams["b_fc"])

    return out[:T, :out_size]


def _spectral_normalize(w):
    # Exact spectral normalization (divide by the top singular value).
    sigma = jnp.linalg.norm(w, ord=2)
    return w / sigma


def init_params(key, C, F, H, O, L):
    D = C * F
    ks = jax.random.split(key, 8)
    w_h = jax.random.normal(ks[2], (L, H, H), jnp.float32) * 0.1
    w_h = jnp.stack([_spectral_normalize(w_h[l]) for l in range(L)])
    return dict(
        ln_w=1.0 + 0.1 * jax.random.normal(ks[6], (1, D), jnp.float32),
        ln_b=0.1 * jax.random.normal(ks[7], (1, D), jnp.float32),
        w_in=_spectral_normalize(jax.random.normal(ks[0], (D, H), jnp.float32) * 0.1),
        b_in=jax.random.normal(ks[1], (1, H), jnp.float32) * 0.01,
        w_h=w_h,
        b_h=jax.random.normal(ks[3], (L, 1, H), jnp.float32) * 0.01,
        w_fc=jax.random.normal(ks[4], (H, O), jnp.float32) * 0.1,
        b_fc=jax.random.normal(ks[5], (1, O), jnp.float32) * 0.01,
    )


def reference_forward(x_ctf, params, *, num_layers):
    C, T, F = x_ctf.shape
    x = jnp.transpose(x_ctf, (1, 0, 2)).reshape(T, C * F)
    mean = jnp.mean(x, axis=-1, keepdims=True)
    var = jnp.mean(jnp.square(x - mean), axis=-1, keepdims=True)
    xn = (x - mean) / jnp.sqrt(var + EPS)
    xn = xn * params["ln_w"] + params["ln_b"]
    h = jnp.maximum(xn @ params["w_in"] + params["b_in"], 0.0)
    for l in range(num_layers):
        h = jnp.maximum(h @ params["w_h"][l] + params["b_h"][l], 0.0)
    return h @ params["w_fc"] + params["b_fc"]


if __name__ == "__main__":
    # Module hyperparameters (small, consistent with the forward pass):
    max_channels, feature_size, hidden_size, output_size, num_layers = 4, 16, 32, 8, 2
    seq_len = 8

    key = jax.random.PRNGKey(0)
    kx, kp, kx2 = jax.random.split(key, 3)
    params = init_params(kp, max_channels, feature_size, hidden_size, output_size, num_layers)

    # --- 1) module-sized input (T=8), f32 matmuls, tight correctness check -------------------
    x = jax.random.normal(kx, (max_channels, seq_len, feature_size), jnp.float32)
    kp_f32 = prepare_params(params, max_channels, feature_size, compute_dtype=jnp.float32)
    out = jax.block_until_ready(
        custom_dl_forward(x, kp_f32, num_layers=num_layers, out_size=output_size))
    ref = reference_forward(x, params, num_layers=num_layers)
    assert out.shape == (seq_len, output_size)
    assert jnp.allclose(out, ref, atol=1e-4, rtol=1e-4), float(jnp.max(jnp.abs(out - ref)))

    # --- 2) bf16 matmul operands (v6e/v7x MXU path; f32 accumulation & VPU math) -------------
    kp_bf16 = prepare_params(params, max_channels, feature_size, compute_dtype=jnp.bfloat16)
    out_bf16 = jax.block_until_ready(
        custom_dl_forward(x, kp_bf16, num_layers=num_layers, out_size=output_size))
    assert out_bf16.shape == (seq_len, output_size)
    assert jnp.allclose(out_bf16, ref, atol=5e-2, rtol=5e-2)

    # --- 3) longer, non-aligned sequence -> multi-step "parallel" grid (both v7x TCs),
    #        128-row tiles (MXU-sized M), row-padding path exercised ---------------------------
    long_T = 500
    x2 = jax.random.normal(kx2, (max_channels, long_T, feature_size), jnp.float32)
    out2 = jax.block_until_ready(
        custom_dl_forward(x2, kp_f32, num_layers=num_layers, out_size=output_size, row_tile=128))
    ref2 = reference_forward(x2, params, num_layers=num_layers)
    assert out2.shape == (long_T, output_size)
    assert jnp.allclose(out2, ref2, atol=1e-4, rtol=1e-4), float(jnp.max(jnp.abs(out2 - ref2)))

    print("KERNEL_OK")
</pallas_src>

<mosaic_0001>
module attributes {stable_mosaic.version = 11 : i64} {
  func.func @custom_dl_kernel(%arg0: i32, %arg1: memref<4x8x16xf32, #tpu.memory_space<vmem>>, %arg2: memref<4x16x32xf32, #tpu.memory_space<vmem>>, %arg3: memref<1x32xf32, #tpu.memory_space<vmem>>, %arg4: memref<1x32xf32, #tpu.memory_space<vmem>>, %arg5: memref<2x32x32xf32, #tpu.memory_space<vmem>>, %arg6: memref<2x1x32xf32, #tpu.memory_space<vmem>>, %arg7: memref<32x128xf32, #tpu.memory_space<vmem>>, %arg8: memref<1x128xf32, #tpu.memory_space<vmem>>, %arg9: memref<8x128xf32, #tpu.memory_space<vmem>>) attributes {dimension_semantics = [#tpu.dimension_semantics<parallel>], iteration_bounds = array<i64: 1>, scalar_prefetch = 0 : i64, scratch_operands = 0 : i64, tpu.core_type = #tpu.core_type<tc>, window_params = [{transform_indices = @transform_0, window_bounds = array<i64: 4, 8, 16>}, {pipeline_mode = #tpu.pipeline_mode<synchronous>, transform_indices = @transform_1, window_bounds = array<i64: 4, 16, 32>}, {pipeline_mode = #tpu.pipeline_mode<synchronous>, transform_indices = @transform_2, window_bounds = array<i64: 1, 32>}, {pipeline_mode = #tpu.pipeline_mode<synchronous>, transform_indices = @transform_3, window_bounds = array<i64: 1, 32>}, {pipeline_mode = #tpu.pipeline_mode<synchronous>, transform_indices = @transform_4, window_bounds = array<i64: 2, 32, 32>}, {pipeline_mode = #tpu.pipeline_mode<synchronous>, transform_indices = @transform_5, window_bounds = array<i64: 2, 1, 32>}, {pipeline_mode = #tpu.pipeline_mode<synchronous>, transform_indices = @transform_6, window_bounds = array<i64: 32, 128>}, {pipeline_mode = #tpu.pipeline_mode<synchronous>, transform_indices = @transform_7, window_bounds = array<i64: 1, 128>}, {transform_indices = @transform_8, window_bounds = array<i64: 8, 128>}]} {
    %c0 = arith.constant 0 : index
    %c0_0 = arith.constant 0 : index
    %c0_1 = arith.constant 0 : index
    %0 = vector.load %arg1[%c0, %c0_0, %c0_1] : memref<4x8x16xf32, #tpu.memory_space<vmem>>, vector<1x8x16xf32>
    %1 = vector.shape_cast %0 : vector<1x8x16xf32> to vector<8x16xf32>
    %c1 = arith.constant 1 : index
    %c0_2 = arith.constant 0 : index
    %c0_3 = arith.constant 0 : index
    %2 = vector.load %arg1[%c1, %c0_2, %c0_3] : memref<4x8x16xf32, #tpu.memory_space<vmem>>, vector<1x8x16xf32>
    %3 = vector.shape_cast %2 : vector<1x8x16xf32> to vector<8x16xf32>
    %c2 = arith.constant 2 : index
    %c0_4 = arith.constant 0 : index
    %c0_5 = arith.constant 0 : index
    %4 = vector.load %arg1[%c2, %c0_4, %c0_5] : memref<4x8x16xf32, #tpu.memory_space<vmem>>, vector<1x8x16xf32>
    %5 = vector.shape_cast %4 : vector<1x8x16xf32> to vector<8x16xf32>
    %c3 = arith.constant 3 : index
    %c0_6 = arith.constant 0 : index
    %c0_7 = arith.constant 0 : index
    %6 = vector.load %arg1[%c3, %c0_6, %c0_7] : memref<4x8x16xf32, #tpu.memory_space<vmem>>, vector<1x8x16xf32>
    %7 = vector.shape_cast %6 : vector<1x8x16xf32> to vector<8x16xf32>
    %8 = arith.addf %1, %3 : vector<8x16xf32>
    %9 = arith.addf %8, %5 : vector<8x16xf32>
    %10 = arith.addf %9, %7 : vector<8x16xf32>
    %cst = arith.constant dense<0.000000e+00> : vector<8xf32>
    %11 = vector.multi_reduction <add>, %10, %cst [1] : vector<8x16xf32> to vector<8xf32>
    %12 = vector.shape_cast %11 : vector<8xf32> to vector<8x1xf32>
    %cst_8 = arith.constant 1.562500e-02 : f32
    %13 = vector.broadcast %cst_8 : f32 to vector<8x1xf32>
    %14 = arith.mulf %12, %13 : vector<8x1xf32>
    %15 = vector.broadcast %14 : vector<8x1xf32> to vector<8x16xf32>
    %16 = arith.subf %1, %15 : vector<8x16xf32>
    %17 = arith.mulf %16, %16 : vector<8x16xf32>
    %18 = vector.broadcast %14 : vector<8x1xf32> to vector<8x16xf32>
    %19 = arith.subf %3, %18 : vector<8x16xf32>
    %20 = arith.mulf %19, %19 : vector<8x16xf32>
    %21 = arith.addf %17, %20 : vector<8x16xf32>
    %22 = vector.broadcast %14 : vector<8x1xf32> to vector<8x16xf32>
    %23 = arith.subf %5, %22 : vector<8x16xf32>
    %24 = arith.mulf %23, %23 : vector<8x16xf32>
    %25 = arith.addf %21, %24 : vector<8x16xf32>
    %26 = vector.broadcast %14 : vector<8x1xf32> to vector<8x16xf32>
    %27 = arith.subf %7, %26 : vector<8x16xf32>
    %28 = arith.mulf %27, %27 : vector<8x16xf32>
    %29 = arith.addf %25, %28 : vector<8x16xf32>
    %cst_9 = arith.constant dense<0.000000e+00> : vector<8xf32>
    %30 = vector.multi_reduction <add>, %29, %cst_9 [1] : vector<8x16xf32> to vector<8xf32>
    %31 = vector.shape_cast %30 : vector<8xf32> to vector<8x1xf32>
    %cst_10 = arith.constant 1.562500e-02 : f32
    %32 = vector.broadcast %cst_10 : f32 to vector<8x1xf32>
    %33 = arith.mulf %31, %32 : vector<8x1xf32>
    %cst_11 = arith.constant 9.99999974E-6 : f32
    %34 = vector.broadcast %cst_11 : f32 to vector<8x1xf32>
    %35 = arith.addf %33, %34 : vector<8x1xf32>
    %36 = math.rsqrt %35 : vector<8x1xf32>
    %c0_12 = arith.constant 0 : index
    %c0_13 = arith.constant 0 : index
    %c0_14 = arith.constant 0 : index
    %37 = vector.load %arg2[%c0_12, %c0_13, %c0_14] : memref<4x16x32xf32, #tpu.memory_space<vmem>>, vector<1x16x32xf32>
    %38 = vector.shape_cast %37 : vector<1x16x32xf32> to vector<16x32xf32>
    %cst_15 = arith.constant dense<0.000000e+00> : vector<8x32xf32>
    %39 = tpu.matmul %1, %38, %cst_15 {dimension_numbers = #tpu.dot_dimension_numbers<[1], [0], [0], [1], [0, 0, 1, 1], [], []>} : vector<8x16xf32>, vector<16x32xf32>, vector<8x32xf32> -> vector<8x32xf32>
    %c1_16 = arith.constant 1 : index
    %c0_17 = arith.constant 0 : index
    %c0_18 = arith.constant 0 : index
    %40 = vector.load %arg2[%c1_16, %c0_17, %c0_18] : memref<4x16x32xf32, #tpu.memory_space<vmem>>, vector<1x16x32xf32>
    %41 = vector.shape_cast %40 : vector<1x16x32xf32> to vector<16x32xf32>
    %cst_19 = arith.constant dense<0.000000e+00> : vector<8x32xf32>
    %42 = tpu.matmul %3, %41, %cst_19 {dimension_numbers = #tpu.dot_dimension_numbers<[1], [0], [0], [1], [0, 0, 1, 1], [], []>} : vector<8x16xf32>, vector<16x32xf32>, vector<8x32xf32> -> vector<8x32xf32>
    %43 = arith.addf %39, %42 : vector<8x32xf32>
    %c2_20 = arith.constant 2 : index
    %c0_21 = arith.constant 0 : index
    %c0_22 = arith.constant 0 : index
    %44 = vector.load %arg2[%c2_20, %c0_21, %c0_22] : memref<4x16x32xf32, #tpu.memory_space<vmem>>, vector<1x16x32xf32>
    %45 = vector.shape_cast %44 : vector<1x16x32xf32> to vector<16x32xf32>
    %cst_23 = arith.constant dense<0.000000e+00> : vector<8x32xf32>
    %46 = tpu.matmul %5, %45, %cst_23 {dimension_numbers = #tpu.dot_dimension_numbers<[1], [0], [0], [1], [0, 0, 1, 1], [], []>} : vector<8x16xf32>, vector<16x32xf32>, vector<8x32xf32> -> vector<8x32xf32>
    %47 = arith.addf %43, %46 : vector<8x32xf32>
    %c3_24 = arith.constant 3 : index
    %c0_25 = arith.constant 0 : index
    %c0_26 = arith.constant 0 : index
    %48 = vector.load %arg2[%c3_24, %c0_25, %c0_26] : memref<4x16x32xf32, #tpu.memory_space<vmem>>, vector<1x16x32xf32>
    %49 = vector.shape_cast %48 : vector<1x16x32xf32> to vector<16x32xf32>
    %cst_27 = arith.constant dense<0.000000e+00> : vector<8x32xf32>
    %50 = tpu.matmul %7, %49, %cst_27 {dimension_numbers = #tpu.dot_dimension_numbers<[1], [0], [0], [1], [0, 0, 1, 1], [], []>} : vector<8x16xf32>, vector<16x32xf32>, vector<8x32xf32> -> vector<8x32xf32>
    %51 = arith.addf %47, %50 : vector<8x32xf32>
    %52 = vector.broadcast %36 : vector<8x1xf32> to vector<8x32xf32>
    %53 = arith.mulf %52, %51 : vector<8x32xf32>
    %54 = arith.mulf %14, %36 : vector<8x1xf32>
    %c0_28 = arith.constant 0 : index
    %c0_29 = arith.constant 0 : index
    %55 = vector.load %arg4[%c0_28, %c0_29] : memref<1x32xf32, #tpu.memory_space<vmem>>, vector<1x32xf32>
    %56 = vector.broadcast %54 : vector<8x1xf32> to vector<8x32xf32>
    %57 = vector.broadcast %55 : vector<1x32xf32> to vector<8x32xf32>
    %58 = arith.mulf %56, %57 : vector<8x32xf32>
    %59 = arith.subf %53, %58 : vector<8x32xf32>
    %c0_30 = arith.constant 0 : index
    %c0_31 = arith.constant 0 : index
    %60 = vector.load %arg3[%c0_30, %c0_31] : memref<1x32xf32, #tpu.memory_space<vmem>>, vector<1x32xf32>
    %61 = vector.broadcast %60 : vector<1x32xf32> to vector<8x32xf32>
    %62 = arith.addf %59, %61 : vector<8x32xf32>
    %cst_32 = arith.constant 0.000000e+00 : f32
    %63 = vector.broadcast %cst_32 : f32 to vector<8x32xf32>
    %64 = arith.maximumf %62, %63 : vector<8x32xf32>
    %c0_33 = arith.constant 0 : index
    %c0_34 = arith.constant 0 : index
    %c0_35 = arith.constant 0 : index
    %65 = vector.load %arg5[%c0_33, %c0_34, %c0_35] : memref<2x32x32xf32, #tpu.memory_space<vmem>>, vector<1x32x32xf32>
    %66 = vector.shape_cast %65 : vector<1x32x32xf32> to vector<32x32xf32>
    %cst_36 = arith.constant dense<0.000000e+00> : vector<8x32xf32>
    %67 = tpu.matmul %64, %66, %cst_36 {dimension_numbers = #tpu.dot_dimension_numbers<[1], [0], [0], [1], [0, 0, 1, 1], [], []>} : vector<8x32xf32>, vector<32x32xf32>, vector<8x32xf32> -> vector<8x32xf32>
    %c0_37 = arith.constant 0 : index
    %c0_38 = arith.constant 0 : index
    %c0_39 = arith.constant 0 : index
    %68 = vector.load %arg6[%c0_37, %c0_38, %c0_39] : memref<2x1x32xf32, #tpu.memory_space<vmem>>, vector<1x1x32xf32>
    %69 = vector.shape_cast %68 : vector<1x1x32xf32> to vector<1x32xf32>
    %70 = vector.broadcast %69 : vector<1x32xf32> to vector<8x32xf32>
    %71 = arith.addf %67, %70 : vector<8x32xf32>
    %cst_40 = arith.constant 0.000000e+00 : f32
    %72 = vector.broadcast %cst_40 : f32 to vector<8x32xf32>
    %73 = arith.maximumf %71, %72 : vector<8x32xf32>
    %c1_41 = arith.constant 1 : index
    %c0_42 = arith.constant 0 : index
    %c0_43 = arith.constant 0 : index
    %74 = vector.load %arg5[%c1_41, %c0_42, %c0_43] : memref<2x32x32xf32, #tpu.memory_space<vmem>>, vector<1x32x32xf32>
    %75 = vector.shape_cast %74 : vector<1x32x32xf32> to vector<32x32xf32>
    %cst_44 = arith.constant dense<0.000000e+00> : vector<8x32xf32>
    %76 = tpu.matmul %73, %75, %cst_44 {dimension_numbers = #tpu.dot_dimension_numbers<[1], [0], [0], [1], [0, 0, 1, 1], [], []>} : vector<8x32xf32>, vector<32x32xf32>, vector<8x32xf32> -> vector<8x32xf32>
    %c1_45 = arith.constant 1 : index
    %c0_46 = arith.constant 0 : index
    %c0_47 = arith.constant 0 : index
    %77 = vector.load %arg6[%c1_45, %c0_46, %c0_47] : memref<2x1x32xf32, #tpu.memory_space<vmem>>, vector<1x1x32xf32>
    %78 = vector.shape_cast %77 : vector<1x1x32xf32> to vector<1x32xf32>
    %79 = vector.broadcast %78 : vector<1x32xf32> to vector<8x32xf32>
    %80 = arith.addf %76, %79 : vector<8x32xf32>
    %cst_48 = arith.constant 0.000000e+00 : f32
    %81 = vector.broadcast %cst_48 : f32 to vector<8x32xf32>
    %82 = arith.maximumf %80, %81 : vector<8x32xf32>
    %c0_49 = arith.constant 0 : index
    %c0_50 = arith.constant 0 : index
    %83 = vector.load %arg7[%c0_49, %c0_50] : memref<32x128xf32, #tpu.memory_space<vmem>>, vector<32x128xf32>
    %cst_51 = arith.constant dense<0.000000e+00> : vector<8x128xf32>
    %84 = tpu.matmul %82, %83, %cst_51 {dimension_numbers = #tpu.dot_dimension_numbers<[1], [0], [0], [1], [0, 0, 1, 1], [], []>} : vector<8x32xf32>, vector<32x128xf32>, vector<8x128xf32> -> vector<8x128xf32>
    %c0_52 = arith.constant 0 : index
    %c0_53 = arith.constant 0 : index
    %85 = vector.load %arg8[%c0_52, %c0_53] : memref<1x128xf32, #tpu.memory_space<vmem>>, vector<1x128xf32>
    %86 = vector.broadcast %85 : vector<1x128xf32> to vector<8x128xf32>
    %87 = arith.addf %84, %86 : vector<8x128xf32>
    %c0_54 = arith.constant 0 : index
    %c0_55 = arith.constant 0 : index
    %88 = vector.load %arg9[%c0_54, %c0_55] : memref<8x128xf32, #tpu.memory_space<vmem>>, vector<8x128xf32>
    tpu.vector_store %arg9[%c0_54, %c0_55], %87 {strides = array<i32>} : memref<8x128xf32, #tpu.memory_space<vmem>>, vector<8x128xf32>,
    return
  }
  func.func @transform_0(%arg0: i32) -> (i32, i32, i32) {
    %c0_i32 = arith.constant 0 : i32
    %c0_i32_0 = arith.constant 0 : i32
    %c0_i32_1 = arith.constant 0 : i32
    return %c0_i32, %arg0, %c0_i32_0 : i32, i32, i32
  }
  func.func @transform_1(%arg0: i32) -> (i32, i32, i32) {
    %c0_i32 = arith.constant 0 : i32
    %c0_i32_0 = arith.constant 0 : i32
    %c0_i32_1 = arith.constant 0 : i32
    %c0_i32_2 = arith.constant 0 : i32
    return %c0_i32, %c0_i32_0, %c0_i32_1 : i32, i32, i32
  }
  func.func @transform_2(%arg0: i32) -> (i32, i32) {
    %c0_i32 = arith.constant 0 : i32
    %c0_i32_0 = arith.constant 0 : i32
    %c0_i32_1 = arith.constant 0 : i32
    return %c0_i32, %c0_i32_0 : i32, i32
  }
  func.func @transform_3(%arg0: i32) -> (i32, i32) {
    %c0_i32 = arith.constant 0 : i32
    %c0_i32_0 = arith.constant 0 : i32
    %c0_i32_1 = arith.constant 0 : i32
    return %c0_i32, %c0_i32_0 : i32, i32
  }
  func.func @transform_4(%arg0: i32) -> (i32, i32, i32) {
    %c0_i32 = arith.constant 0 : i32
    %c0_i32_0 = arith.constant 0 : i32
    %c0_i32_1 = arith.constant 0 : i32
    %c0_i32_2 = arith.constant 0 : i32
    return %c0_i32, %c0_i32_0, %c0_i32_1 : i32, i32, i32
  }
  func.func @transform_5(%arg0: i32) -> (i32, i32, i32) {
    %c0_i32 = arith.constant 0 : i32
    %c0_i32_0 = arith.constant 0 : i32
    %c0_i32_1 = arith.constant 0 : i32
    %c0_i32_2 = arith.constant 0 : i32
    return %c0_i32, %c0_i32_0, %c0_i32_1 : i32, i32, i32
  }
  func.func @transform_6(%arg0: i32) -> (i32, i32) {
    %c0_i32 = arith.constant 0 : i32
    %c0_i32_0 = arith.constant 0 : i32
    %c0_i32_1 = arith.constant 0 : i32
    return %c0_i32, %c0_i32_0 : i32, i32
  }
  func.func @transform_7(%arg0: i32) -> (i32, i32) {
    %c0_i32 = arith.constant 0 : i32
    %c0_i32_0 = arith.constant 0 : i32
    %c0_i32_1 = arith.constant 0 : i32
    return %c0_i32, %c0_i32_0 : i32, i32
  }
  func.func @transform_8(%arg0: i32) -> (i32, i32) {
    %c0_i32 = arith.constant 0 : i32
    %c0_i32_0 = arith.constant 0 : i32
    return %arg0, %c0_i32 : i32, i32
  }
}

</mosaic_0001>

<llo_original>
// kernel: tpu_custom_call.1
$region0: #{tpu_custom_call.1}
  #allocation0 [shape = 'u32[]', space=smem, size = 0x4, offset = 0x4, fixed_abs, tag = 'smem constant byte address 0x4 - core index']
  #allocation1 [shape = 'u32[144,128]{1,0:T(1,128)}', space=vmem, size = 0x12000, scoped, tag = 'internal scratch']
  %s0 = inlined_call_operand.hbm [shape: f32[4,8,16], index: 0, kind: input, shape index: {}]
  %s1 = inlined_call_operand.hbm [shape: f32[4,16,32], index: 1, kind: input, shape index: {}]
  %s2 = inlined_call_operand.vmem [shape: f32[1,32], index: 2, kind: input, shape index: {}]
  %s3 = inlined_call_operand.vmem [shape: f32[1,32], index: 3, kind: input, shape index: {}]
  %s4 = inlined_call_operand.hbm [shape: f32[2,32,32], index: 4, kind: input, shape index: {}]
  %s5 = inlined_call_operand.vmem [shape: f32[2,1,32], index: 5, kind: input, shape index: {}]
  %s6 = inlined_call_operand.hbm [shape: f32[32,128], index: 6, kind: input, shape index: {}]
  %s7 = inlined_call_operand.vmem [shape: f32[1,128], index: 7, kind: input, shape index: {}]
  %s8 = inlined_call_operand.hbm [shape: f32[8,128], index: 8, kind: output, shape index: {}]
  %s9 = sld [smem:[#allocation0]]
  $region58: #{tpu_custom_call.1} parent=0
    _
  %s11 = ssub.s32 1, %s9
  %s12 = scalar_select 0, %s11, %s9
  $region1: #{tpu_custom_call.1} parent=0
    #allocation2 [shape = 'u8[16384]{0}', space=vmem, size = 0x4000, scoped, tag = 'input window, operand 0, single buffered']
    #allocation3 [shape = 's32[1]{0}', space=sflag, size = 0x4, scoped, tag = 'scoped memory for tpu_custom_call.1']
    #allocation4 [shape = 's32[1]{0}', space=sflag, size = 0x4, scoped, tag = 'scoped memory for tpu_custom_call.1']
    #allocation5 [shape = 'u8[32768]{0}', space=vmem, size = 0x8000, scoped, tag = 'input window, operand 1, single buffered']
    #allocation6 [shape = 's32[1]{0}', space=sflag, size = 0x4, scoped, tag = 'scoped memory for tpu_custom_call.1']
    #allocation7 [shape = 'u8[32768]{0}', space=vmem, size = 0x8000, scoped, tag = 'input window, operand 4, single buffered']
    #allocation8 [shape = 'u8[16384]{0}', space=vmem, size = 0x4000, scoped, tag = 'input window, operand 6, single buffered']
    #allocation9 [shape = 's32[1]{0}', space=sflag, size = 0x4, scoped, tag = 'scoped memory for tpu_custom_call.1']
    #allocation10 [shape = 'u8[4096]{0}', space=vmem, size = 0x1000, scoped, tag = 'output window, operand 0, single buffered']
    %13 = vsyncpa [#allocation3], 0
    %14 = vsyncpa [#allocation6], 0
    %15 = vsyncpa [#allocation9], 0
    %16 = vsyncpa [#allocation4], 0
    // Predicated region
    $region2: #{tpu_custom_call.1} parent=1 // pred_check
      _
    $region3: #{tpu_custom_call.1} parent=1 // pred_check_branch
      %18 = sbr.rel (0) target = $region5
    $region4: #{tpu_custom_call.1} parent=1 // pred_region
      %s20 = ssub.s32 512, 512
      %21 = vsyncadd [#allocation3], %s20
      %s22 = sshll.u32 [#allocation2], 4
      %s23 = int_to_ptr.vmem [resolvable:$true] %s22
      %28 = dma.hbm_to_vmem [thread:$0]  %s0, 512, %s23, [#allocation3], 128, 128, 8
    $region5: #{tpu_custom_call.1} parent=1 // pred_fallthru
      _
    // Predicated region
    $region6: #{tpu_custom_call.1} parent=1 // pred_check
      _
    $region7: #{tpu_custom_call.1} parent=1 // pred_check_branch
      %30 = sbr.rel (0) target = $region9
    $region8: #{tpu_custom_call.1} parent=1 // pred_region
      %s32 = ssub.s32 1024, 1024
      %33 = vsyncadd [#allocation6], %s32
      %s34 = sshll.u32 [#allocation5], 4
      %s35 = int_to_ptr.vmem [resolvable:$true] %s34
      %40 = dma.hbm_to_vmem [thread:$0]  %s1, 1024, %s35, [#allocation6], 128, 128, 8
    $region9: #{tpu_custom_call.1} parent=1 // pred_fallthru
      _
    // Predicated region
    $region10: #{tpu_custom_call.1} parent=1 // pred_check
      _
    $region11: #{tpu_custom_call.1} parent=1 // pred_check_branch
      %42 = sbr.rel (0) target = $region13
    $region12: #{tpu_custom_call.1} parent=1 // pred_region
      _
    $region13: #{tpu_custom_call.1} parent=1 // pred_fallthru
      _
    // Predicated region
    $region14: #{tpu_custom_call.1} parent=1 // pred_check
      _
    $region15: #{tpu_custom_call.1} parent=1 // pred_check_branch
      %44 = sbr.rel (0) target = $region17
    $region16: #{tpu_custom_call.1} parent=1 // pred_region
      _
    $region17: #{tpu_custom_call.1} parent=1 // pred_fallthru
      _
    // Predicated region
    $region18: #{tpu_custom_call.1} parent=1 // pred_check
      _
    $region19: #{tpu_custom_call.1} parent=1 // pred_check_branch
      %46 = sbr.rel (0) target = $region21
    $region20: #{tpu_custom_call.1} parent=1 // pred_region
      %s48 = ssub.s32 1024, 1024
      %49 = vsyncadd [#allocation6], %s48
      %s50 = sshll.u32 [#allocation7], 4
      %s51 = int_to_ptr.vmem [resolvable:$true] %s50
      %56 = dma.hbm_to_vmem [thread:$0]  %s4, 1024, %s51, [#allocation6], 128, 128, 8
    $region21: #{tpu_custom_call.1} parent=1 // pred_fallthru
      _
    // Predicated region
    $region22: #{tpu_custom_call.1} parent=1 // pred_check
      _
    $region23: #{tpu_custom_call.1} parent=1 // pred_check_branch
      %58 = sbr.rel (0) target = $region25
    $region24: #{tpu_custom_call.1} parent=1 // pred_region
      _
    $region25: #{tpu_custom_call.1} parent=1 // pred_fallthru
      _
    // Predicated region
    $region26: #{tpu_custom_call.1} parent=1 // pred_check
      _
    $region27: #{tpu_custom_call.1} parent=1 // pred_check_branch
      %60 = sbr.rel (0) target = $region29
    $region28: #{tpu_custom_call.1} parent=1 // pred_region
      %s62 = ssub.s32 512, 512
      %63 = vsyncadd [#allocation9], %s62
      %s64 = sshll.u32 [#allocation8], 4
      %s65 = int_to_ptr.vmem [resolvable:$true] %s64
      %70 = dma.hbm_to_vmem [thread:$0]  %s6, 512, %s65, [#allocation9], 128, 128, 8
    $region29: #{tpu_custom_call.1} parent=1 // pred_fallthru
      _
    // Predicated region
    $region30: #{tpu_custom_call.1} parent=1 // pred_check
      _
    $region31: #{tpu_custom_call.1} parent=1 // pred_check_branch
      %72 = sbr.rel (0) target = $region33
    $region32: #{tpu_custom_call.1} parent=1 // pred_region
      _
    $region33: #{tpu_custom_call.1} parent=1 // pred_fallthru
      _
    // Predicated region
    $region34: #{tpu_custom_call.1} parent=1 // pred_check
      _
    $region35: #{tpu_custom_call.1} parent=1 // pred_check_branch
      %74 = sbr.rel (0) target = $region37
    $region36: #{tpu_custom_call.1} parent=1 // pred_region
      %75 = dma.done [#allocation3], 512
    $region37: #{tpu_custom_call.1} parent=1 // pred_fallthru
      _
    // Predicated region
    $region38: #{tpu_custom_call.1} parent=1 // pred_check
      _
    $region39: #{tpu_custom_call.1} parent=1 // pred_check_branch
      %77 = sbr.rel (0) target = $region41
    $region40: #{tpu_custom_call.1} parent=1 // pred_region
      %78 = dma.done [#allocation6], 1024
    $region41: #{tpu_custom_call.1} parent=1 // pred_fallthru
      _
    // Predicated region
    $region42: #{tpu_custom_call.1} parent=1 // pred_check
      _
    $region43: #{tpu_custom_call.1} parent=1 // pred_check_branch
      %80 = sbr.rel (0) target = $region45
    $region44: #{tpu_custom_call.1} parent=1 // pred_region
      %81 = dma.done [#allocation6], 1024
    $region45: #{tpu_custom_call.1} parent=1 // pred_fallthru
      _
    // Predicated region
    $region46: #{tpu_custom_call.1} parent=1 // pred_check
      _
    $region47: #{tpu_custom_call.1} parent=1 // pred_check_branch
      %83 = sbr.rel (0) target = $region49
    $region48: #{tpu_custom_call.1} parent=1 // pred_region
      %84 = dma.done [#allocation9], 512
    $region49: #{tpu_custom_call.1} parent=1 // pred_fallthru
      _
    %v85 = vld [vmem:[#allocation2] sm:$0xff]
    %s86 = scalar_lea.vmem [#allocation2], 8
    %v87 = vld [vmem:[%s86] sm:$0xff]
    %s88 = scalar_lea.vmem [#allocation2], 16
    %v89 = vld [vmem:[%s88] sm:$0xff]
    %s90 = scalar_lea.vmem [#allocation2], 24
    %v91 = vld [vmem:[%s90] sm:$0xff]
    %v92 = vadd.f32 %v85, %v87
    %v93 = vadd.f32 %v92, %v89
    %v94 = vadd.f32 %v93, %v91
    %vm95 = vcmask 130048
    %v96 = vsel %vm95, %v94, 0.0
    %97 = vadd.xlane.f32.xlu0 %v96
    %v98 = vpop.xlane.xlu0 %97
    %v99 = vmul.f32 %v98, 0.015625
    %v100 = vsub.f32 %v85, %v99
    %v101 = vmul.f32 %v100, %v100
    %v102 = vsub.f32 %v87, %v99
    %v103 = vmul.f32 %v102, %v102
    %v104 = vadd.f32 %v101, %v103
    %v105 = vsub.f32 %v89, %v99
    %v106 = vmul.f32 %v105, %v105
    %v107 = vadd.f32 %v104, %v106
    %v108 = vsub.f32 %v91, %v99
    %v109 = vmul.f32 %v108, %v108
    %v110 = vadd.f32 %v107, %v109
    %v111 = vsel %vm95, %v110, 0.0
    %112 = vadd.xlane.f32.xlu0 %v111
    %v113 = vpop.xlane.xlu0 %112
    %v114 = vmul.f32 %v113, 0.015625
    %v115 = vadd.f32 %v114, 1e-05
    %v116 = vrsqrt.pop %v115
    %v117 = vld [vmem:[#allocation5] sm:$0xff]
    %v118 = vld [vmem:[#allocation5 + $0x8] sm:$0xff]
    %s119 = scalar_lea.vmem [#allocation5], 16
    %v120 = vld [vmem:[%s119] sm:$0xff]
    %v121 = vld [vmem:[%s119 + $0x8] sm:$0xff]
    %v123 = vsel %vm95, %v87, 0
    %125 = vmatprep.subr.mxu0 0.0
    %126 = vmatpush1.msra.mxu0 %v120
    %127 = vmatprep.subr.mxu0 0.0
    %128 = vmatpush1.msra.mxu0 %v121
    %129 = vmatprep.subr.mxu0 0.0
    %130 = vmatpush1.msra.mxu0 0.0
    %131 = vmatprep.subr.mxu0 0.0
    %132 = vmatpush1.msra.mxu0 0.0
    %133 = vmatprep.subr.mxu0 0.0
    %134 = vmatpush1.msra.mxu0 0.0
    %135 = vmatprep.subr.mxu0 0.0
    %136 = vmatpush1.msra.mxu0 0.0
    %137 = vmatprep.subr.mxu0 0.0
    %138 = vmatpush1.msra.mxu0 0.0
    %139 = vmatprep.subr.mxu0 0.0
    %140 = vmatpush1.msra.mxu0 0.0
    %141 = vmatprep.subr.mxu0 0.0
    %142 = vmatpush1.msra.mxu0 0.0
    %143 = vmatprep.subr.mxu0 0.0
    %144 = vmatpush1.msra.mxu0 0.0
    %145 = vmatprep.subr.mxu0 0.0
    %146 = vmatpush1.msra.mxu0 0.0
    %147 = vmatprep.subr.mxu0 0.0
    %148 = vmatpush1.msra.mxu0 0.0
    %149 = vmatprep.subr.mxu0 0.0
    %150 = vmatpush1.msra.mxu0 0.0
    %151 = vmatprep.subr.mxu0 0.0
    %152 = vmatpush1.msra.mxu0 0.0
    %153 = vmatprep.subr.mxu0 0.0
    %154 = vmatpush1.msra.mxu0 0.0
    %155 = vmatprep.subr.mxu0 0.0
    %156 = vmatpush1.msra.mxu0 0.0
    %157 = vmatprep.subr.mxu0 0.0
    %158 = vmatpush1.msra.mxu0 0.0
    %159 = vmatprep.subr.mxu0 0.0
    %160 = vmatpush1.msra.mxu0 0.0
    %161 = vmatprep.subr.mxu0 0.0
    %162 = vmatpush1.msra.mxu0 0.0
    %163 = vmatprep.subr.mxu0 0.0
    %164 = vmatpush1.msra.mxu0 0.0
    %165 = vmatprep.subr.mxu0 0.0
    %166 = vmatpush1.msra.mxu0 0.0
    %167 = vmatprep.subr.mxu0 0.0
    %168 = vmatpush1.msra.mxu0 0.0
    %169 = vmatprep.subr.mxu0 0.0
    %170 = vmatpush1.msra.mxu0 0.0
    %171 = vmatprep.subr.mxu0 0.0
    %172 = vmatpush1.msra.mxu0 0.0
    %173 = vmatprep.subr.mxu0 0.0
    %174 = vmatpush1.msra.mxu0 0.0
    %175 = vmatprep.subr.mxu0 0.0
    %176 = vmatpush1.msra.mxu0 0.0
    %177 = vmatprep.subr.mxu0 0.0
    %178 = vmatpush1.msra.mxu0 0.0
    %179 = vmatprep.subr.mxu0 0.0
    %180 = vmatpush1.msra.mxu0 0.0
    %181 = vmatprep.subr.mxu0 0.0
    %182 = vmatpush1.msra.mxu0 0.0
    %183 = vmatprep.subr.mxu0 0.0
    %184 = vmatpush1.msra.mxu0 0.0
    %185 = vmatprep.subr.mxu0 0.0
    %186 = vmatpush1.msra.mxu0 0.0
    %187 = vmatprep.subr.mxu0 0.0
    %188 = vmatpush1.msra.mxu0 0.0
    %189 = vmatprep.mubr.f32.mxu0 0.0
    %190 = vmatmul.mubr.f32.gmra.mrb[0].mxu0 %v123
    %v191 = vpop.f32.mrb[0].mxu0
    %v192 = vadd.f32 0.0, %v191
    %v193 = vpop.f32.mrb[0].mxu0
    %194 = vdwg.mxu0
    %v196 = vsel %vm95, %v85, 0
    %198 = vmatprep.subr.mxu0 0.0
    %199 = vmatpush1.msra.mxu0 %v117
    %200 = vmatprep.subr.mxu0 0.0
    %201 = vmatpush1.msra.mxu0 %v118
    %202 = vmatprep.subr.mxu0 0.0
    %203 = vmatpush1.msra.mxu0 0.0
    %204 = vmatprep.subr.mxu0 0.0
    %205 = vmatpush1.msra.mxu0 0.0
    %206 = vmatprep.subr.mxu0 0.0
    %207 = vmatpush1.msra.mxu0 0.0
    %208 = vmatprep.subr.mxu0 0.0
    %209 = vmatpush1.msra.mxu0 0.0
    %210 = vmatprep.subr.mxu0 0.0
    %211 = vmatpush1.msra.mxu0 0.0
    %212 = vmatprep.subr.mxu0 0.0
    %213 = vmatpush1.msra.mxu0 0.0
    %214 = vmatprep.subr.mxu0 0.0
    %215 = vmatpush1.msra.mxu0 0.0
    %216 = vmatprep.subr.mxu0 0.0
    %217 = vmatpush1.msra.mxu0 0.0
    %218 = vmatprep.subr.mxu0 0.0
    %219 = vmatpush1.msra.mxu0 0.0
    %220 = vmatprep.subr.mxu0 0.0
    %221 = vmatpush1.msra.mxu0 0.0
    %222 = vmatprep.subr.mxu0 0.0
    %223 = vmatpush1.msra.mxu0 0.0
    %224 = vmatprep.subr.mxu0 0.0
    %225 = vmatpush1.msra.mxu0 0.0
    %226 = vmatprep.subr.mxu0 0.0
    %227 = vmatpush1.msra.mxu0 0.0
    %228 = vmatprep.subr.mxu0 0.0
    %229 = vmatpush1.msra.mxu0 0.0
    %230 = vmatprep.subr.mxu0 0.0
    %231 = vmatpush1.msra.mxu0 0.0
    %232 = vmatprep.subr.mxu0 0.0
    %233 = vmatpush1.msra.mxu0 0.0
    %234 = vmatprep.subr.mxu0 0.0
    %235 = vmatpush1.msra.mxu0 0.0
    %236 = vmatprep.subr.mxu0 0.0
    %237 = vmatpush1.msra.mxu0 0.0
    %238 = vmatprep.subr.mxu0 0.0
    %239 = vmatpush1.msra.mxu0 0.0
    %240 = vmatprep.subr.mxu0 0.0
    %241 = vmatpush1.msra.mxu0 0.0
    %242 = vmatprep.subr.mxu0 0.0
    %243 = vmatpush1.msra.mxu0 0.0
    %244 = vmatprep.subr.mxu0 0.0
    %245 = vmatpush1.msra.mxu0 0.0
    %246 = vmatprep.subr.mxu0 0.0
    %247 = vmatpush1.msra.mxu0 0.0
    %248 = vmatprep.subr.mxu0 0.0
    %249 = vmatpush1.msra.mxu0 0.0
    %250 = vmatprep.subr.mxu0 0.0
    %251 = vmatpush1.msra.mxu0 0.0
    %252 = vmatprep.subr.mxu0 0.0
    %253 = vmatpush1.msra.mxu0 0.0
    %254 = vmatprep.subr.mxu0 0.0
    %255 = vmatpush1.msra.mxu0 0.0
    %256 = vmatprep.subr.mxu0 0.0
    %257 = vmatpush1.msra.mxu0 0.0
    %258 = vmatprep.subr.mxu0 0.0
    %259 = vmatpush1.msra.mxu0 0.0
    %260 = vmatprep.subr.mxu0 0.0
    %261 = vmatpush1.msra.mxu0 0.0
    %262 = vmatprep.mubr.f32.mxu0 0.0
    %263 = vmatmul.mubr.f32.gmra.mrb[0].mxu0 %v196
    %v264 = vpop.f32.mrb[0].mxu0
    %v265 = vadd.f32 %v192, %v264
    %v266 = vpop.f32.mrb[0].mxu0
    %267 = vdwg.mxu0
    %s268 = scalar_lea.vmem [#allocation5], 32
    %v269 = vld [vmem:[%s268] sm:$0xff]
    %v270 = vld [vmem:[%s268 + $0x8] sm:$0xff]
    %v272 = vsel %vm95, %v89, 0
    %274 = vmatprep.subr.mxu0 0.0
    %275 = vmatpush1.msra.mxu0 %v269
    %276 = vmatprep.subr.mxu0 0.0
    %277 = vmatpush1.msra.mxu0 %v270
    %278 = vmatprep.subr.mxu0 0.0
    %279 = vmatpush1.msra.mxu0 0.0
    %280 = vmatprep.subr.mxu0 0.0
    %281 = vmatpush1.msra.mxu0 0.0
    %282 = vmatprep.subr.mxu0 0.0
    %283 = vmatpush1.msra.mxu0 0.0
    %284 = vmatprep.subr.mxu0 0.0
    %285 = vmatpush1.msra.mxu0 0.0
    %286 = vmatprep.subr.mxu0 0.0
    %287 = vmatpush1.msra.mxu0 0.0
    %288 = vmatprep.subr.mxu0 0.0
    %289 = vmatpush1.msra.mxu0 0.0
    %290 = vmatprep.subr.mxu0 0.0
    %291 = vmatpush1.msra.mxu0 0.0
    %292 = vmatprep.subr.mxu0 0.0
    %293 = vmatpush1.msra.mxu0 0.0
    %294 = vmatprep.subr.mxu0 0.0
    %295 = vmatpush1.msra.mxu0 0.0
    %296 = vmatprep.subr.mxu0 0.0
    %297 = vmatpush1.msra.mxu0 0.0
    %298 = vmatprep.subr.mxu0 0.0
    %299 = vmatpush1.msra.mxu0 0.0
    %300 = vmatprep.subr.mxu0 0.0
    %301 = vmatpush1.msra.mxu0 0.0
    %302 = vmatprep.subr.mxu0 0.0
    %303 = vmatpush1.msra.mxu0 0.0
    %304 = vmatprep.subr.mxu0 0.0
    %305 = vmatpush1.msra.mxu0 0.0
    %306 = vmatprep.subr.mxu0 0.0
    %307 = vmatpush1.msra.mxu0 0.0
    %308 = vmatprep.subr.mxu0 0.0
    %309 = vmatpush1.msra.mxu0 0.0
    %310 = vmatprep.subr.mxu0 0.0
    %311 = vmatpush1.msra.mxu0 0.0
    %312 = vmatprep.subr.mxu0 0.0
    %313 = vmatpush1.msra.mxu0 0.0
    %314 = vmatprep.subr.mxu0 0.0
    %315 = vmatpush1.msra.mxu0 0.0
    %316 = vmatprep.subr.mxu0 0.0
    %317 = vmatpush1.msra.mxu0 0.0
    %318 = vmatprep.subr.mxu0 0.0
    %319 = vmatpush1.msra.mxu0 0.0
    %320 = vmatprep.subr.mxu0 0.0
    %321 = vmatpush1.msra.mxu0 0.0
    %322 = vmatprep.subr.mxu0 0.0
    %323 = vmatpush1.msra.mxu0 0.0
    %324 = vmatprep.subr.mxu0 0.0
    %325 = vmatpush1.msra.mxu0 0.0
    %326 = vmatprep.subr.mxu0 0.0
    %327 = vmatpush1.msra.mxu0 0.0
    %328 = vmatprep.subr.mxu0 0.0
    %329 = vmatpush1.msra.mxu0 0.0
    %330 = vmatprep.subr.mxu0 0.0
    %331 = vmatpush1.msra.mxu0 0.0
    %332 = vmatprep.subr.mxu0 0.0
    %333 = vmatpush1.msra.mxu0 0.0
    %334 = vmatprep.subr.mxu0 0.0
    %335 = vmatpush1.msra.mxu0 0.0
    %336 = vmatprep.subr.mxu0 0.0
    %337 = vmatpush1.msra.mxu0 0.0
    %338 = vmatprep.mubr.f32.mxu0 0.0
    %339 = vmatmul.mubr.f32.gmra.mrb[0].mxu0 %v272
    %v340 = vpop.f32.mrb[0].mxu0
    %v341 = vadd.f32 0.0, %v340
    %v342 = vpop.f32.mrb[0].mxu0
    %343 = vdwg.mxu0
    %v344 = vadd.f32 %v265, %v341
    %s345 = scalar_lea.vmem [#allocation5], 48
    %v346 = vld [vmem:[%s345] sm:$0xff]
    %v347 = vld [vmem:[%s345 + $0x8] sm:$0xff]
    %v349 = vsel %vm95, %v91, 0
    %351 = vmatprep.subr.mxu0 0.0
    %352 = vmatpush1.msra.mxu0 %v346
    %353 = vmatprep.subr.mxu0 0.0
    %354 = vmatpush1.msra.mxu0 %v347
    %355 = vmatprep.subr.mxu0 0.0
    %356 = vmatpush1.msra.mxu0 0.0
    %357 = vmatprep.subr.mxu0 0.0
    %358 = vmatpush1.msra.mxu0 0.0
    %359 = vmatprep.subr.mxu0 0.0
    %360 = vmatpush1.msra.mxu0 0.0
    %361 = vmatprep.subr.mxu0 0.0
    %362 = vmatpush1.msra.mxu0 0.0
    %363 = vmatprep.subr.mxu0 0.0
    %364 = vmatpush1.msra.mxu0 0.0
    %365 = vmatprep.subr.mxu0 0.0
    %366 = vmatpush1.msra.mxu0 0.0
    %367 = vmatprep.subr.mxu0 0.0
    %368 = vmatpush1.msra.mxu0 0.0
    %369 = vmatprep.subr.mxu0 0.0
    %370 = vmatpush1.msra.mxu0 0.0
    %371 = vmatprep.subr.mxu0 0.0
    %372 = vmatpush1.msra.mxu0 0.0
    %373 = vmatprep.subr.mxu0 0.0
    %374 = vmatpush1.msra.mxu0 0.0
    %375 = vmatprep.subr.mxu0 0.0
    %376 = vmatpush1.msra.mxu0 0.0
    %377 = vmatprep.subr.mxu0 0.0
    %378 = vmatpush1.msra.mxu0 0.0
    %379 = vmatprep.subr.mxu0 0.0
    %380 = vmatpush1.msra.mxu0 0.0
    %381 = vmatprep.subr.mxu0 0.0
    %382 = vmatpush1.msra.mxu0 0.0
    %383 = vmatprep.subr.mxu0 0.0
    %384 = vmatpush1.msra.mxu0 0.0
    %385 = vmatprep.subr.mxu0 0.0
    %386 = vmatpush1.msra.mxu0 0.0
    %387 = vmatprep.subr.mxu0 0.0
    %388 = vmatpush1.msra.mxu0 0.0
    %389 = vmatprep.subr.mxu0 0.0
    %390 = vmatpush1.msra.mxu0 0.0
    %391 = vmatprep.subr.mxu0 0.0
    %392 = vmatpush1.msra.mxu0 0.0
    %393 = vmatprep.subr.mxu0 0.0
    %394 = vmatpush1.msra.mxu0 0.0
    %395 = vmatprep.subr.mxu0 0.0
    %396 = vmatpush1.msra.mxu0 0.0
    %397 = vmatprep.subr.mxu0 0.0
    %398 = vmatpush1.msra.mxu0 0.0
    %399 = vmatprep.subr.mxu0 0.0
    %400 = vmatpush1.msra.mxu0 0.0
    %401 = vmatprep.subr.mxu0 0.0
    %402 = vmatpush1.msra.mxu0 0.0
    %403 = vmatprep.subr.mxu0 0.0
    %404 = vmatpush1.msra.mxu0 0.0
    %405 = vmatprep.subr.mxu0 0.0
    %406 = vmatpush1.msra.mxu0 0.0
    %407 = vmatprep.subr.mxu0 0.0
    %408 = vmatpush1.msra.mxu0 0.0
    %409 = vmatprep.subr.mxu0 0.0
    %410 = vmatpush1.msra.mxu0 0.0
    %411 = vmatprep.subr.mxu0 0.0
    %412 = vmatpush1.msra.mxu0 0.0
    %413 = vmatprep.subr.mxu0 0.0
    %414 = vmatpush1.msra.mxu0 0.0
    %415 = vmatprep.mubr.f32.mxu0 0.0
    %416 = vmatmul.mubr.f32.gmra.mrb[0].mxu0 %v349
    %v417 = vpop.f32.mrb[0].mxu0
    %v418 = vadd.f32 0.0, %v417
    %v419 = vpop.f32.mrb[0].mxu0
    %420 = vdwg.mxu0
    %v421 = vadd.f32 %v344, %v418
    %v422 = vmul.f32 %v116, %v421
    %v423 = vmul.f32 %v99, %v116
    %v424 = vld [vmem:[%s3] sm:$0x1]
    %v426 = vlaneseq
    %v427 = vshrl.u32 %v426, 7
    %v428 = vsub.s32 0, %v427
    %v429 = vrot.slane %v424, %v428
    %v431 = vmul.f32 %v423, %v429
    %v432 = vsub.f32 %v422, %v431
    %v433 = vld [vmem:[%s2] sm:$0x1]
    %v435 = vlaneseq
    %v436 = vshrl.u32 %v435, 7
    %v437 = vsub.s32 0, %v436
    %v438 = vrot.slane %v433, %v437
    %v440 = vadd.f32 %v432, %v438
    %v441 = vmax.f32 %v440, 0.0
    %v442 = vld [vmem:[#allocation7] sm:$0xff]
    %v443 = vld [vmem:[#allocation7 + $0x8] sm:$0xff]
    %v444 = vld [vmem:[#allocation7 + $0x10] sm:$0xff]
    %v445 = vld [vmem:[#allocation7 + $0x18] sm:$0xff]
    %v446 = vld [vmem:[%s5] sm:$0x1]
    %v448 = vlaneseq
    %v449 = vshrl.u32 %v448, 7
    %v450 = vsub.s32 0, %v449
    %v451 = vrot.slane %v446, %v450
    %vm453 = vcmask 261120
    %v455 = vsel %vm453, %v441, 0
    %457 = vmatprep.subr.mxu0 0.0
    %458 = vmatpush1.msra.mxu0 %v442
    %459 = vmatprep.subr.mxu0 0.0
    %460 = vmatpush1.msra.mxu0 %v443
    %461 = vmatprep.subr.mxu0 0.0
    %462 = vmatpush1.msra.mxu0 %v444
    %463 = vmatprep.subr.mxu0 0.0
    %464 = vmatpush1.msra.mxu0 %v445
    %465 = vmatprep.subr.mxu0 0.0
    %466 = vmatpush1.msra.mxu0 0.0
    %467 = vmatprep.subr.mxu0 0.0
    %468 = vmatpush1.msra.mxu0 0.0
    %469 = vmatprep.subr.mxu0 0.0
    %470 = vmatpush1.msra.mxu0 0.0
    %471 = vmatprep.subr.mxu0 0.0
    %472 = vmatpush1.msra.mxu0 0.0
    %473 = vmatprep.subr.mxu0 0.0
    %474 = vmatpush1.msra.mxu0 0.0
    %475 = vmatprep.subr.mxu0 0.0
    %476 = vmatpush1.msra.mxu0 0.0
    %477 = vmatprep.subr.mxu0 0.0
    %478 = vmatpush1.msra.mxu0 0.0
    %479 = vmatprep.subr.mxu0 0.0
    %480 = vmatpush1.msra.mxu0 0.0
    %481 = vmatprep.subr.mxu0 0.0
    %482 = vmatpush1.msra.mxu0 0.0
    %483 = vmatprep.subr.mxu0 0.0
    %484 = vmatpush1.msra.mxu0 0.0
    %485 = vmatprep.subr.mxu0 0.0
    %486 = vmatpush1.msra.mxu0 0.0
    %487 = vmatprep.subr.mxu0 0.0
    %488 = vmatpush1.msra.mxu0 0.0
    %489 = vmatprep.subr.mxu0 0.0
    %490 = vmatpush1.msra.mxu0 0.0
    %491 = vmatprep.subr.mxu0 0.0
    %492 = vmatpush1.msra.mxu0 0.0
    %493 = vmatprep.subr.mxu0 0.0
    %494 = vmatpush1.msra.mxu0 0.0
    %495 = vmatprep.subr.mxu0 0.0
    %496 = vmatpush1.msra.mxu0 0.0
    %497 = vmatprep.subr.mxu0 0.0
    %498 = vmatpush1.msra.mxu0 0.0
    %499 = vmatprep.subr.mxu0 0.0
    %500 = vmatpush1.msra.mxu0 0.0
    %501 = vmatprep.subr.mxu0 0.0
    %502 = vmatpush1.msra.mxu0 0.0
    %503 = vmatprep.subr.mxu0 0.0
    %504 = vmatpush1.msra.mxu0 0.0
    %505 = vmatprep.subr.mxu0 0.0
    %506 = vmatpush1.msra.mxu0 0.0
    %507 = vmatprep.subr.mxu0 0.0
    %508 = vmatpush1.msra.mxu0 0.0
    %509 = vmatprep.subr.mxu0 0.0
    %510 = vmatpush1.msra.mxu0 0.0
    %511 = vmatprep.subr.mxu0 0.0
    %512 = vmatpush1.msra.mxu0 0.0
    %513 = vmatprep.subr.mxu0 0.0
    %514 = vmatpush1.msra.mxu0 0.0
    %515 = vmatprep.subr.mxu0 0.0
    %516 = vmatpush1.msra.mxu0 0.0
    %517 = vmatprep.subr.mxu0 0.0
    %518 = vmatpush1.msra.mxu0 0.0
    %519 = vmatprep.subr.mxu0 0.0
    %520 = vmatpush1.msra.mxu0 0.0
    %521 = vmatprep.mubr.f32.mxu0 0.0
    %522 = vmatmul.mubr.f32.gmra.mrb[0].mxu0 %v455
    %v523 = vpop.f32.mrb[0].mxu0
    %v524 = vadd.f32 %v451, %v523
    %v525 = vpop.f32.mrb[0].mxu0
    %526 = vdwg.mxu0
    %v527 = vmax.f32 %v524, 0.0
    %s528 = scalar_lea.vmem [#allocation7], 32
    %v529 = vld [vmem:[%s528] sm:$0xff]
    %v530 = vld [vmem:[%s528 + $0x8] sm:$0xff]
    %v531 = vld [vmem:[%s528 + $0x10] sm:$0xff]
    %v532 = vld [vmem:[%s528 + $0x18] sm:$0xff]
    %s533 = scalar_lea.vmem %s5, 1
    %v534 = vld [vmem:[%s533] sm:$0x1]
    %v536 = vlaneseq
    %v537 = vshrl.u32 %v536, 7
    %v538 = vsub.s32 0, %v537
    %v539 = vrot.slane %v534, %v538
    %v542 = vsel %vm453, %v527, 0
    %544 = vmatprep.subr.mxu0 0.0
    %545 = vmatpush1.msra.mxu0 %v529
    %546 = vmatprep.subr.mxu0 0.0
    %547 = vmatpush1.msra.mxu0 %v530
    %548 = vmatprep.subr.mxu0 0.0
    %549 = vmatpush1.msra.mxu0 %v531
    %550 = vmatprep.subr.mxu0 0.0
    %551 = vmatpush1.msra.mxu0 %v532
    %552 = vmatprep.subr.mxu0 0.0
    %553 = vmatpush1.msra.mxu0 0.0
    %554 = vmatprep.subr.mxu0 0.0
    %555 = vmatpush1.msra.mxu0 0.0
    %556 = vmatprep.subr.mxu0 0.0
    %557 = vmatpush1.msra.mxu0 0.0
    %558 = vmatprep.subr.mxu0 0.0
    %559 = vmatpush1.msra.mxu0 0.0
    %560 = vmatprep.subr.mxu0 0.0
    %561 = vmatpush1.msra.mxu0 0.0
    %562 = vmatprep.subr.mxu0 0.0
    %563 = vmatpush1.msra.mxu0 0.0
    %564 = vmatprep.subr.mxu0 0.0
    %565 = vmatpush1.msra.mxu0 0.0
    %566 = vmatprep.subr.mxu0 0.0
    %567 = vmatpush1.msra.mxu0 0.0
    %568 = vmatprep.subr.mxu0 0.0
    %569 = vmatpush1.msra.mxu0 0.0
    %570 = vmatprep.subr.mxu0 0.0
    %571 = vmatpush1.msra.mxu0 0.0
    %572 = vmatprep.subr.mxu0 0.0
    %573 = vmatpush1.msra.mxu0 0.0
    %574 = vmatprep.subr.mxu0 0.0
    %575 = vmatpush1.msra.mxu0 0.0
    %576 = vmatprep.subr.mxu0 0.0
    %577 = vmatpush1.msra.mxu0 0.0
    %578 = vmatprep.subr.mxu0 0.0
    %579 = vmatpush1.msra.mxu0 0.0
    %580 = vmatprep.subr.mxu0 0.0
    %581 = vmatpush1.msra.mxu0 0.0
    %582 = vmatprep.subr.mxu0 0.0
    %583 = vmatpush1.msra.mxu0 0.0
    %584 = vmatprep.subr.mxu0 0.0
    %585 = vmatpush1.msra.mxu0 0.0
    %586 = vmatprep.subr.mxu0 0.0
    %587 = vmatpush1.msra.mxu0 0.0
    %588 = vmatprep.subr.mxu0 0.0
    %589 = vmatpush1.msra.mxu0 0.0
    %590 = vmatprep.subr.mxu0 0.0
    %591 = vmatpush1.msra.mxu0 0.0
    %592 = vmatprep.subr.mxu0 0.0
    %593 = vmatpush1.msra.mxu0 0.0
    %594 = vmatprep.subr.mxu0 0.0
    %595 = vmatpush1.msra.mxu0 0.0
    %596 = vmatprep.subr.mxu0 0.0
    %597 = vmatpush1.msra.mxu0 0.0
    %598 = vmatprep.subr.mxu0 0.0
    %599 = vmatpush1.msra.mxu0 0.0
    %600 = vmatprep.subr.mxu0 0.0
    %601 = vmatpush1.msra.mxu0 0.0
    %602 = vmatprep.subr.mxu0 0.0
    %603 = vmatpush1.msra.mxu0 0.0
    %604 = vmatprep.subr.mxu0 0.0
    %605 = vmatpush1.msra.mxu0 0.0
    %606 = vmatprep.subr.mxu0 0.0
    %607 = vmatpush1.msra.mxu0 0.0
    %608 = vmatprep.mubr.f32.mxu0 0.0
    %609 = vmatmul.mubr.f32.gmra.mrb[0].mxu0 %v542
    %v610 = vpop.f32.mrb[0].mxu0
    %v611 = vadd.f32 %v539, %v610
    %v612 = vpop.f32.mrb[0].mxu0
    %613 = vdwg.mxu0
    %v614 = vmax.f32 %v611, 0.0
    %v615 = vld [vmem:[#allocation8] sm:$0xff]
    %v616 = vld [vmem:[#allocation8 + $0x8] sm:$0xff]
    %v617 = vld [vmem:[#allocation8 + $0x10] sm:$0xff]
    %v618 = vld [vmem:[#allocation8 + $0x18] sm:$0xff]
    %v619 = vld [vmem:[%s7] sm:$0x1]
    %v621 = vlaneseq
    %v622 = vshrl.u32 %v621, 7
    %v623 = vsub.s32 0, %v622
    %v624 = vrot.slane %v619, %v623
    %v627 = vsel %vm453, %v614, 0
    %629 = vmatprep.subr.mxu0 0.0
    %630 = vmatpush1.msra.mxu0 %v615
    %631 = vmatprep.subr.mxu0 0.0
    %632 = vmatpush1.msra.mxu0 %v616
    %633 = vmatprep.subr.mxu0 0.0
    %634 = vmatpush1.msra.mxu0 %v617
    %635 = vmatprep.subr.mxu0 0.0
    %636 = vmatpush1.msra.mxu0 %v618
    %637 = vmatprep.subr.mxu0 0.0
    %638 = vmatpush1.msra.mxu0 0.0
    %639 = vmatprep.subr.mxu0 0.0
    %640 = vmatpush1.msra.mxu0 0.0
    %641 = vmatprep.subr.mxu0 0.0
    %642 = vmatpush1.msra.mxu0 0.0
    %643 = vmatprep.subr.mxu0 0.0
    %644 = vmatpush1.msra.mxu0 0.0
    %645 = vmatprep.subr.mxu0 0.0
    %646 = vmatpush1.msra.mxu0 0.0
    %647 = vmatprep.subr.mxu0 0.0
    %648 = vmatpush1.msra.mxu0 0.0
    %649 = vmatprep.subr.mxu0 0.0
    %650 = vmatpush1.msra.mxu0 0.0
    %651 = vmatprep.subr.mxu0 0.0
    %652 = vmatpush1.msra.mxu0 0.0
    %653 = vmatprep.subr.mxu0 0.0
    %654 = vmatpush1.msra.mxu0 0.0
    %655 = vmatprep.subr.mxu0 0.0
    %656 = vmatpush1.msra.mxu0 0.0
    %657 = vmatprep.subr.mxu0 0.0
    %658 = vmatpush1.msra.mxu0 0.0
    %659 = vmatprep.subr.mxu0 0.0
    %660 = vmatpush1.msra.mxu0 0.0
    %661 = vmatprep.subr.mxu0 0.0
    %662 = vmatpush1.msra.mxu0 0.0
    %663 = vmatprep.subr.mxu0 0.0
    %664 = vmatpush1.msra.mxu0 0.0
    %665 = vmatprep.subr.mxu0 0.0
    %666 = vmatpush1.msra.mxu0 0.0
    %667 = vmatprep.subr.mxu0 0.0
    %668 = vmatpush1.msra.mxu0 0.0
    %669 = vmatprep.subr.mxu0 0.0
    %670 = vmatpush1.msra.mxu0 0.0
    %671 = vmatprep.subr.mxu0 0.0
    %672 = vmatpush1.msra.mxu0 0.0
    %673 = vmatprep.subr.mxu0 0.0
    %674 = vmatpush1.msra.mxu0 0.0
    %675 = vmatprep.subr.mxu0 0.0
    %676 = vmatpush1.msra.mxu0 0.0
    %677 = vmatprep.subr.mxu0 0.0
    %678 = vmatpush1.msra.mxu0 0.0
    %679 = vmatprep.subr.mxu0 0.0
    %680 = vmatpush1.msra.mxu0 0.0
    %681 = vmatprep.subr.mxu0 0.0
    %682 = vmatpush1.msra.mxu0 0.0
    %683 = vmatprep.subr.mxu0 0.0
    %684 = vmatpush1.msra.mxu0 0.0
    %685 = vmatprep.subr.mxu0 0.0
    %686 = vmatpush1.msra.mxu0 0.0
    %687 = vmatprep.subr.mxu0 0.0
    %688 = vmatpush1.msra.mxu0 0.0
    %689 = vmatprep.subr.mxu0 0.0
    %690 = vmatpush1.msra.mxu0 0.0
    %691 = vmatprep.subr.mxu0 0.0
    %692 = vmatpush1.msra.mxu0 0.0
    %693 = vmatprep.mubr.f32.mxu0 0.0
    %694 = vmatmul.mubr.f32.gmra.mrb[0].mxu0 %v627
    %v695 = vpop.f32.mrb[0].mxu0
    %v696 = vadd.f32 %v624, %v695
    %v697 = vpop.f32.mrb[0].mxu0
    %698 = vdwg.mxu0
    %699 = vst [vmem:[#allocation10] sm:$0xff] %v696
    // Predicated region
    $region50: #{tpu_custom_call.1} parent=1 // pred_check
      _
    $region51: #{tpu_custom_call.1} parent=1 // pred_check_branch
      %701 = sbr.rel (0) target = $region53
    $region52: #{tpu_custom_call.1} parent=1 // pred_region
      %s703 = ssub.s32 128, 128
      %704 = vsyncadd [#allocation4], %s703
      %s706 = sshll.u32 [#allocation10], 4
      %s707 = int_to_ptr.vmem [resolvable:$true] %s706
      %709 = dma.vmem_to_hbm [thread:$0]  %s707, 128, %s8, [#allocation4]
    $region53: #{tpu_custom_call.1} parent=1 // pred_fallthru
      _
    // Predicated region
    $region54: #{tpu_custom_call.1} parent=1 // pred_check
      _
    $region55: #{tpu_custom_call.1} parent=1 // pred_check_branch
      %711 = sbr.rel (0) target = $region57
    $region56: #{tpu_custom_call.1} parent=1 // pred_region
      %712 = dma.done [#allocation4], 128
    $region57: #{tpu_custom_call.1} parent=1 // pred_fallthru
      _
    %713 = vsyncpa [#allocation3], 1
    %714 = vsyncpa [#allocation6], 1
    %715 = vsyncpa [#allocation9], 1
    %716 = vsyncpa [#allocation4], 1

</llo_original>
